<compile_context>
chip_gen: v5e
topology: v5e:2x2
jax: 0.10.0
libtpu: 0.0.40
codegen_flags: <defaults>
</compile_context>

<pallas_src>
import math
import functools

import jax
import jax.numpy as jnp
import numpy as np
from jax.experimental import pallas as pl
from jax.experimental.pallas import tpu as pltpu


def _largest_divisor_leq(n, cap):
    """Largest divisor of n that is <= cap (so time chunks tile T exactly)."""
    cap = max(1, min(n, cap))
    for d in range(cap, 0, -1):
        if n % d == 0:
            return d
    return 1


def _sublstm_kernel(gx_ref, whh_ref, out_ref, cN_ref, h_sc, c_sc):
    """One grid step = `tb` timesteps of the recurrence for one batch chunk.

    gx_ref : (tb, BB, 4H) f32   precomputed x_t @ W_ih^T + (b_ih + b_hh)
    whh_ref: (H, 4H)            resident recurrent weight (f32 or bf16)
    out_ref: (tb, BB, H)        per-step hidden outputs for this chunk
    cN_ref : (BB, H)            final cell state (written on last time chunk)
    h_sc/c_sc: (BB, H) f32      recurrent state carried across time chunks
    """
    ti = pl.program_id(1)                       # time-chunk index (sequential)

    # Zero initial hidden/cell state (hx=None path) at the start of each
    # batch chunk's time sweep.
    @pl.when(ti == 0)
    def _():
        h_sc[...] = jnp.zeros_like(h_sc)
        c_sc[...] = jnp.zeros_like(c_sc)

    whh = whh_ref[...]                          # hoisted load, stays in vregs/VMEM
    H = h_sc.shape[-1]
    tb = gx_ref.shape[0]

    def step(s, carry):
        h, c = carry
        # Recurrent matmul on the MXU (f32 accumulation), gate math in f32.
        gates = gx_ref[s] + jnp.dot(h.astype(whh.dtype), whh,
                                    preferred_element_type=jnp.float32)
        gates = jax.nn.sigmoid(gates)           # all subLSTM gates are sigmoid
        i_g = gates[:, 0 * H:1 * H]
        f_g = gates[:, 1 * H:2 * H]
        z_g = gates[:, 2 * H:3 * H]
        o_g = gates[:, 3 * H:4 * H]
        c_new = f_g * c + (z_g - i_g)           # subtractive cell update
        h_new = jax.nn.sigmoid(c_new) - o_g     # subtractive output
        out_ref[s] = h_new.astype(out_ref.dtype)
        return h_new, c_new

    # Carry h/c as loop values (vregs); unroll for LLO scheduler visibility.
    h, c = jax.lax.fori_loop(0, tb, step, (h_sc[...], c_sc[...]), unroll=True)

    # Persist state for the next time chunk.
    h_sc[...] = h
    c_sc[...] = c

    # Final cell state: single store on the last time chunk only
    # (h_T is recovered from out[-1] in the wrapper).
    @pl.when(ti == pl.num_programs(1) - 1)
    def _():
        cN_ref[...] = c.astype(cN_ref.dtype)


@functools.partial(jax.jit,
                   static_argnames=("time_block", "batch_block", "matmul_dtype"))
def sublstm_forward(x, w_ih, w_hh, b_ih, b_hh, *,
                    time_block=32, batch_block=None,
                    matmul_dtype=jnp.float32):
    """x: (T, B, I).  Returns (output (T,B,H), (h_T, c_T)).

    time_block : max timesteps per grid step (largest divisor of T is used).
    batch_block: batch-chunk size (multiple of 8). A value < padded B creates a
                 leading 'parallel' grid axis so v7x can shard across its 2 TCs.
    matmul_dtype: dtype of MXU operands (f32 or bf16); accumulation is f32 and
                 the elementwise gate path stays f32 on all generations.
    """
    T, B, I = x.shape
    G, _ = w_ih.shape
    H = G // 4

    # ---- pad batch to a sublane multiple (>= 8) so MXU rows / stores are dense
    B_pad = max(8, ((B + 7) // 8) * 8)
    if B_pad != B:
        x = jnp.pad(x, ((0, 0), (0, B_pad - B), (0, 0)))

    # ---- tiling ----
    if batch_block is None:
        batch_block = B_pad
    assert B_pad % batch_block == 0 and batch_block % 8 == 0
    nb = B_pad // batch_block                       # 'parallel' batch chunks
    tb = _largest_divisor_leq(T, time_block)        # timesteps per grid step
    nt = T // tb                                    # sequential time chunks

    # ---- hoisted input projection: one big MXU-shaped matmul (XLA) ----
    # gx[t, b, :] = x[t, b] @ W_ih^T + (b_ih + b_hh), kept in f32.
    bias = (b_ih + b_hh).astype(jnp.float32)
    wih_t = jnp.transpose(w_ih).astype(matmul_dtype)            # (I, 4H)
    gx = jnp.dot(x.reshape(T * B_pad, I).astype(matmul_dtype), wih_t,
                 preferred_element_type=jnp.float32)
    gx = (gx + bias).reshape(T, B_pad, G)                        # (T, B_pad, 4H)

    whh_t = jnp.transpose(w_hh).astype(matmul_dtype)             # (H, 4H)

    out_shapes = (
        jax.ShapeDtypeStruct((T, B_pad, H), x.dtype),  # per-step hidden outputs
        jax.ShapeDtypeStruct((B_pad, H), x.dtype),     # final c
    )

    # NOTE: for production sizes, choose H as a multiple of 128 so the gate
    # slices are lane-aligned and the h_t stores are unmasked; for large H on
    # v7x, keep whh in bf16 (halves the resident-weight footprint).
    grid_spec = pltpu.PrefetchScalarGridSpec(
        num_scalar_prefetch=0,
        grid=(nb, nt),
        in_specs=[
            pl.BlockSpec((tb, batch_block, G), lambda j, i: (i, j, 0)),  # gx chunk
            pl.BlockSpec((H, G), lambda j, i: (0, 0)),                   # W_hh^T (resident)
        ],
        out_specs=[
            pl.BlockSpec((tb, batch_block, H), lambda j, i: (i, j, 0)),  # h_t block
            pl.BlockSpec((batch_block, H), lambda j, i: (j, 0)),         # final c
        ],
        scratch_shapes=[
            pltpu.VMEM((batch_block, H), jnp.float32),   # h state (across chunks)
            pltpu.VMEM((batch_block, H), jnp.float32),   # c state (across chunks)
        ],
    )

    out, c_T = pl.pallas_call(
        _sublstm_kernel,
        out_shape=out_shapes,
        grid_spec=grid_spec,
        compiler_params=pltpu.CompilerParams(
            # batch chunks are independent -> 'parallel' (v7x 2-TC sharding);
            # the recurrence over time chunks must stay sequential.
            dimension_semantics=("parallel", "arbitrary"),
            vmem_limit_bytes=32 * 1024 * 1024,
        ),
    )(gx, whh_t)

    # Strip batch padding; h_T is simply the last output row.
    out = out[:, :B, :]
    c_T = c_T[:B, :]
    h_T = out[T - 1]
    return out, (h_T, c_T)


def sublstm_reference(x, w_ih, w_hh, b_ih, b_hh):
    """Pure-JAX reference (mirrors the PyTorch SubLSTMCellF loop)."""
    T, B, I = x.shape
    H = w_hh.shape[1]
    h = jnp.zeros((B, H), x.dtype)
    c = jnp.zeros((B, H), x.dtype)

    def step(carry, x_t):
        h, c = carry
        gates = x_t @ w_ih.T + b_ih + h @ w_hh.T + b_hh
        gates = jax.nn.sigmoid(gates)
        i_g, f_g, z_g, o_g = jnp.split(gates, 4, axis=-1)
        c_new = f_g * c + (z_g - i_g)
        h_new = jax.nn.sigmoid(c_new) - o_g
        return (h_new, c_new), h_new

    (h_T, c_T), hs = jax.lax.scan(step, (h, c), x)
    return hs, (h_T, c_T)


if __name__ == "__main__":
    # Shapes consistent with the module: seq=8, batch=4, input=16, hidden=32.
    T, B, I, H = 8, 4, 16, 32
    G = 4 * H
    stdv = 1.0 / math.sqrt(H)

    key = jax.random.PRNGKey(0)
    kx, k1, k2, k3, k4 = jax.random.split(key, 5)

    x = jax.random.normal(kx, (T, B, I), dtype=jnp.float32)
    # reset_parameters(): uniform(-stdv, stdv) for every parameter.
    w_ih = jax.random.uniform(k1, (G, I), jnp.float32, -stdv, stdv)
    w_hh = jax.random.uniform(k2, (G, H), jnp.float32, -stdv, stdv)
    b_ih = jax.random.uniform(k3, (G,), jnp.float32, -stdv, stdv)
    b_hh = jax.random.uniform(k4, (G,), jnp.float32, -stdv, stdv)

    ref_out, (ref_h, ref_c) = sublstm_reference(x, w_ih, w_hh, b_ih, b_hh)

    # 1) f32 MXU path: bit-for-bit-ish against the reference.
    out, (h_T, c_T) = sublstm_forward(x, w_ih, w_hh, b_ih, b_hh,
                                      matmul_dtype=jnp.float32)
    jax.block_until_ready(out)
    np.testing.assert_allclose(np.asarray(out), np.asarray(ref_out), rtol=1e-5, atol=1e-5)
    np.testing.assert_allclose(np.asarray(h_T), np.asarray(ref_h), rtol=1e-5, atol=1e-5)
    np.testing.assert_allclose(np.asarray(c_T), np.asarray(ref_c), rtol=1e-5, atol=1e-5)

    # 2) bf16-matmul perf path (f32 accumulation + f32 gate math): looser tolerance.
    out16, (h16, c16) = sublstm_forward(x, w_ih, w_hh, b_ih, b_hh,
                                        matmul_dtype=jnp.bfloat16)
    jax.block_until_ready(out16)
    np.testing.assert_allclose(np.asarray(out16), np.asarray(ref_out), rtol=2e-2, atol=2e-2)
    np.testing.assert_allclose(np.asarray(c16), np.asarray(ref_c), rtol=2e-2, atol=2e-2)

    # 3) Exercise multiple time chunks + a parallel batch-chunk axis
    #    (the v7x two-TensorCore configuration).
    T2, B2 = 6, 12
    x2 = jax.random.normal(jax.random.PRNGKey(1), (T2, B2, I), dtype=jnp.float32)
    ref2_out, (ref2_h, ref2_c) = sublstm_reference(x2, w_ih, w_hh, b_ih, b_hh)
    out2, (h2, c2) = sublstm_forward(x2, w_ih, w_hh, b_ih, b_hh,
                                     matmul_dtype=jnp.float32,
                                     time_block=3, batch_block=8)
    jax.block_until_ready(out2)
    np.testing.assert_allclose(np.asarray(out2), np.asarray(ref2_out), rtol=1e-5, atol=1e-5)
    np.testing.assert_allclose(np.asarray(h2), np.asarray(ref2_h), rtol=1e-5, atol=1e-5)
    np.testing.assert_allclose(np.asarray(c2), np.asarray(ref2_c), rtol=1e-5, atol=1e-5)

    print("KERNEL_OK")
</pallas_src>

<mosaic_0001>
module attributes {stable_mosaic.version = 11 : i64} {
  func.func @_sublstm_kernel(%arg0: i32, %arg1: i32, %arg2: memref<8x8x128xf32, #tpu.memory_space<vmem>>, %arg3: memref<32x128xf32, #tpu.memory_space<vmem>>, %arg4: memref<8x8x32xf32, #tpu.memory_space<vmem>>, %arg5: memref<8x32xf32, #tpu.memory_space<vmem>>, %arg6: memref<8x32xf32, #tpu.memory_space<vmem>>, %arg7: memref<8x32xf32, #tpu.memory_space<vmem>>) attributes {dimension_semantics = [#tpu.dimension_semantics<parallel>, #tpu.dimension_semantics<arbitrary>], iteration_bounds = array<i64: 1, 1>, scalar_prefetch = 0 : i64, scratch_operands = 2 : i64, tpu.core_type = #tpu.core_type<tc>, window_params = [{transform_indices = @transform_0, window_bounds = array<i64: 8, 8, 128>}, {pipeline_mode = #tpu.pipeline_mode<synchronous>, transform_indices = @transform_1, window_bounds = array<i64: 32, 128>}, {transform_indices = @transform_2, window_bounds = array<i64: 8, 8, 32>}, {transform_indices = @transform_3, window_bounds = array<i64: 8, 32>}]} {
    %c0_i32 = arith.constant 0 : i32
    %0 = arith.cmpi eq, %arg1, %c0_i32 : i32
    %1 = arith.extui %0 : i1 to i32
    %c0_i32_0 = arith.constant 0 : i32
    %2 = arith.cmpi ne, %1, %c0_i32_0 : i32
    scf.if %2 {
      %cst_68 = arith.constant 0.000000e+00 : f32
      %227 = vector.broadcast %cst_68 : f32 to vector<8x32xf32>
      %c0_69 = arith.constant 0 : index
      %c0_70 = arith.constant 0 : index
      %228 = vector.load %arg6[%c0_69, %c0_70] : memref<8x32xf32, #tpu.memory_space<vmem>>, vector<8x32xf32>
      tpu.vector_store %arg6[%c0_69, %c0_70], %227 {strides = array<i32>} : memref<8x32xf32, #tpu.memory_space<vmem>>, vector<8x32xf32>,
      %cst_71 = arith.constant 0.000000e+00 : f32
      %229 = vector.broadcast %cst_71 : f32 to vector<8x32xf32>
      %c0_72 = arith.constant 0 : index
      %c0_73 = arith.constant 0 : index
      %230 = vector.load %arg7[%c0_72, %c0_73] : memref<8x32xf32, #tpu.memory_space<vmem>>, vector<8x32xf32>
      tpu.vector_store %arg7[%c0_72, %c0_73], %229 {strides = array<i32>} : memref<8x32xf32, #tpu.memory_space<vmem>>, vector<8x32xf32>,
    } else {
    }
    %c0 = arith.constant 0 : index
    %c0_1 = arith.constant 0 : index
    %3 = vector.load %arg3[%c0, %c0_1] : memref<32x128xf32, #tpu.memory_space<vmem>>, vector<32x128xf32>
    %c0_2 = arith.constant 0 : index
    %c0_3 = arith.constant 0 : index
    %4 = vector.load %arg6[%c0_2, %c0_3] : memref<8x32xf32, #tpu.memory_space<vmem>>, vector<8x32xf32>
    %c0_4 = arith.constant 0 : index
    %c0_5 = arith.constant 0 : index
    %5 = vector.load %arg7[%c0_4, %c0_5] : memref<8x32xf32, #tpu.memory_space<vmem>>, vector<8x32xf32>
    %c0_i32_6 = arith.constant 0 : i32
    %6 = arith.index_cast %c0_i32_6 : i32 to index
    %c0_7 = arith.constant 0 : index
    %c0_8 = arith.constant 0 : index
    %7 = vector.load %arg2[%6, %c0_7, %c0_8] : memref<8x8x128xf32, #tpu.memory_space<vmem>>, vector<1x8x128xf32>
    %8 = vector.shape_cast %7 : vector<1x8x128xf32> to vector<8x128xf32>
    %cst = arith.constant dense<0.000000e+00> : vector<8x128xf32>
    %9 = tpu.matmul %4, %3, %cst {dimension_numbers = #tpu.dot_dimension_numbers<[1], [0], [0], [1], [0, 0, 1, 1], [], []>} : vector<8x32xf32>, vector<32x128xf32>, vector<8x128xf32> -> vector<8x128xf32>
    %10 = arith.addf %8, %9 : vector<8x128xf32>
    %11 = arith.negf %10 : vector<8x128xf32>
    %12 = math.exp %11 : vector<8x128xf32>
    %cst_9 = arith.constant 1.000000e+00 : f32
    %13 = vector.broadcast %cst_9 : f32 to vector<8x128xf32>
    %14 = arith.addf %13, %12 : vector<8x128xf32>
    %15 = arith.divf %13, %14 : vector<8x128xf32>
    %16 = vector.extract_strided_slice %15 {offsets = [0, 0], sizes = [8, 32], strides = [1, 1]} : vector<8x128xf32> to vector<8x32xf32>
    %17 = vector.extract_strided_slice %15 {offsets = [0, 32], sizes = [8, 32], strides = [1, 1]} : vector<8x128xf32> to vector<8x32xf32>
    %18 = vector.extract_strided_slice %15 {offsets = [0, 64], sizes = [8, 32], strides = [1, 1]} : vector<8x128xf32> to vector<8x32xf32>
    %19 = vector.extract_strided_slice %15 {offsets = [0, 96], sizes = [8, 32], strides = [1, 1]} : vector<8x128xf32> to vector<8x32xf32>
    %20 = arith.mulf %17, %5 : vector<8x32xf32>
    %21 = arith.subf %18, %16 : vector<8x32xf32>
    %22 = arith.addf %20, %21 : vector<8x32xf32>
    %23 = arith.negf %22 : vector<8x32xf32>
    %24 = math.exp %23 : vector<8x32xf32>
    %cst_10 = arith.constant 1.000000e+00 : f32
    %25 = vector.broadcast %cst_10 : f32 to vector<8x32xf32>
    %26 = arith.addf %25, %24 : vector<8x32xf32>
    %27 = arith.divf %25, %26 : vector<8x32xf32>
    %28 = arith.subf %27, %19 : vector<8x32xf32>
    %29 = arith.index_cast %c0_i32_6 : i32 to index
    %c0_11 = arith.constant 0 : index
    %c0_12 = arith.constant 0 : index
    %30 = vector.load %arg4[%29, %c0_11, %c0_12] : memref<8x8x32xf32, #tpu.memory_space<vmem>>, vector<1x8x32xf32>
    %31 = vector.shape_cast %30 : vector<1x8x32xf32> to vector<8x32xf32>
    %32 = vector.shape_cast %28 : vector<8x32xf32> to vector<1x8x32xf32>
    tpu.vector_store %arg4[%29, %c0_11, %c0_12], %32 {strides = array<i32>} : memref<8x8x32xf32, #tpu.memory_space<vmem>>, vector<1x8x32xf32>,
    %c1_i32 = arith.constant 1 : i32
    %33 = arith.index_cast %c1_i32 : i32 to index
    %c0_13 = arith.constant 0 : index
    %c0_14 = arith.constant 0 : index
    %34 = vector.load %arg2[%33, %c0_13, %c0_14] : memref<8x8x128xf32, #tpu.memory_space<vmem>>, vector<1x8x128xf32>
    %35 = vector.shape_cast %34 : vector<1x8x128xf32> to vector<8x128xf32>
    %cst_15 = arith.constant dense<0.000000e+00> : vector<8x128xf32>
    %36 = tpu.matmul %28, %3, %cst_15 {dimension_numbers = #tpu.dot_dimension_numbers<[1], [0], [0], [1], [0, 0, 1, 1], [], []>} : vector<8x32xf32>, vector<32x128xf32>, vector<8x128xf32> -> vector<8x128xf32>
    %37 = arith.addf %35, %36 : vector<8x128xf32>
    %38 = arith.negf %37 : vector<8x128xf32>
    %39 = math.exp %38 : vector<8x128xf32>
    %cst_16 = arith.constant 1.000000e+00 : f32
    %40 = vector.broadcast %cst_16 : f32 to vector<8x128xf32>
    %41 = arith.addf %40, %39 : vector<8x128xf32>
    %42 = arith.divf %40, %41 : vector<8x128xf32>
    %43 = vector.extract_strided_slice %42 {offsets = [0, 0], sizes = [8, 32], strides = [1, 1]} : vector<8x128xf32> to vector<8x32xf32>
    %44 = vector.extract_strided_slice %42 {offsets = [0, 32], sizes = [8, 32], strides = [1, 1]} : vector<8x128xf32> to vector<8x32xf32>
    %45 = vector.extract_strided_slice %42 {offsets = [0, 64], sizes = [8, 32], strides = [1, 1]} : vector<8x128xf32> to vector<8x32xf32>
    %46 = vector.extract_strided_slice %42 {offsets = [0, 96], sizes = [8, 32], strides = [1, 1]} : vector<8x128xf32> to vector<8x32xf32>
    %47 = arith.mulf %44, %22 : vector<8x32xf32>
    %48 = arith.subf %45, %43 : vector<8x32xf32>
    %49 = arith.addf %47, %48 : vector<8x32xf32>
    %50 = arith.negf %49 : vector<8x32xf32>
    %51 = math.exp %50 : vector<8x32xf32>
    %cst_17 = arith.constant 1.000000e+00 : f32
    %52 = vector.broadcast %cst_17 : f32 to vector<8x32xf32>
    %53 = arith.addf %52, %51 : vector<8x32xf32>
    %54 = arith.divf %52, %53 : vector<8x32xf32>
    %55 = arith.subf %54, %46 : vector<8x32xf32>
    %56 = arith.index_cast %c1_i32 : i32 to index
    %c0_18 = arith.constant 0 : index
    %c0_19 = arith.constant 0 : index
    %57 = vector.load %arg4[%56, %c0_18, %c0_19] : memref<8x8x32xf32, #tpu.memory_space<vmem>>, vector<1x8x32xf32>
    %58 = vector.shape_cast %57 : vector<1x8x32xf32> to vector<8x32xf32>
    %59 = vector.shape_cast %55 : vector<8x32xf32> to vector<1x8x32xf32>
    tpu.vector_store %arg4[%56, %c0_18, %c0_19], %59 {strides = array<i32>} : memref<8x8x32xf32, #tpu.memory_space<vmem>>, vector<1x8x32xf32>,
    %c2_i32 = arith.constant 2 : i32
    %60 = arith.index_cast %c2_i32 : i32 to index
    %c0_20 = arith.constant 0 : index
    %c0_21 = arith.constant 0 : index
    %61 = vector.load %arg2[%60, %c0_20, %c0_21] : memref<8x8x128xf32, #tpu.memory_space<vmem>>, vector<1x8x128xf32>
    %62 = vector.shape_cast %61 : vector<1x8x128xf32> to vector<8x128xf32>
    %cst_22 = arith.constant dense<0.000000e+00> : vector<8x128xf32>
    %63 = tpu.matmul %55, %3, %cst_22 {dimension_numbers = #tpu.dot_dimension_numbers<[1], [0], [0], [1], [0, 0, 1, 1], [], []>} : vector<8x32xf32>, vector<32x128xf32>, vector<8x128xf32> -> vector<8x128xf32>
    %64 = arith.addf %62, %63 : vector<8x128xf32>
    %65 = arith.negf %64 : vector<8x128xf32>
    %66 = math.exp %65 : vector<8x128xf32>
    %cst_23 = arith.constant 1.000000e+00 : f32
    %67 = vector.broadcast %cst_23 : f32 to vector<8x128xf32>
    %68 = arith.addf %67, %66 : vector<8x128xf32>
    %69 = arith.divf %67, %68 : vector<8x128xf32>
    %70 = vector.extract_strided_slice %69 {offsets = [0, 0], sizes = [8, 32], strides = [1, 1]} : vector<8x128xf32> to vector<8x32xf32>
    %71 = vector.extract_strided_slice %69 {offsets = [0, 32], sizes = [8, 32], strides = [1, 1]} : vector<8x128xf32> to vector<8x32xf32>
    %72 = vector.extract_strided_slice %69 {offsets = [0, 64], sizes = [8, 32], strides = [1, 1]} : vector<8x128xf32> to vector<8x32xf32>
    %73 = vector.extract_strided_slice %69 {offsets = [0, 96], sizes = [8, 32], strides = [1, 1]} : vector<8x128xf32> to vector<8x32xf32>
    %74 = arith.mulf %71, %49 : vector<8x32xf32>
    %75 = arith.subf %72, %70 : vector<8x32xf32>
    %76 = arith.addf %74, %75 : vector<8x32xf32>
    %77 = arith.negf %76 : vector<8x32xf32>
    %78 = math.exp %77 : vector<8x32xf32>
    %cst_24 = arith.constant 1.000000e+00 : f32
    %79 = vector.broadcast %cst_24 : f32 to vector<8x32xf32>
    %80 = arith.addf %79, %78 : vector<8x32xf32>
    %81 = arith.divf %79, %80 : vector<8x32xf32>
    %82 = arith.subf %81, %73 : vector<8x32xf32>
    %83 = arith.index_cast %c2_i32 : i32 to index
    %c0_25 = arith.constant 0 : index
    %c0_26 = arith.constant 0 : index
    %84 = vector.load %arg4[%83, %c0_25, %c0_26] : memref<8x8x32xf32, #tpu.memory_space<vmem>>, vector<1x8x32xf32>
    %85 = vector.shape_cast %84 : vector<1x8x32xf32> to vector<8x32xf32>
    %86 = vector.shape_cast %82 : vector<8x32xf32> to vector<1x8x32xf32>
    tpu.vector_store %arg4[%83, %c0_25, %c0_26], %86 {strides = array<i32>} : memref<8x8x32xf32, #tpu.memory_space<vmem>>, vector<1x8x32xf32>,
    %c3_i32 = arith.constant 3 : i32
    %87 = arith.index_cast %c3_i32 : i32 to index
    %c0_27 = arith.constant 0 : index
    %c0_28 = arith.constant 0 : index
    %88 = vector.load %arg2[%87, %c0_27, %c0_28] : memref<8x8x128xf32, #tpu.memory_space<vmem>>, vector<1x8x128xf32>
    %89 = vector.shape_cast %88 : vector<1x8x128xf32> to vector<8x128xf32>
    %cst_29 = arith.constant dense<0.000000e+00> : vector<8x128xf32>
    %90 = tpu.matmul %82, %3, %cst_29 {dimension_numbers = #tpu.dot_dimension_numbers<[1], [0], [0], [1], [0, 0, 1, 1], [], []>} : vector<8x32xf32>, vector<32x128xf32>, vector<8x128xf32> -> vector<8x128xf32>
    %91 = arith.addf %89, %90 : vector<8x128xf32>
    %92 = arith.negf %91 : vector<8x128xf32>
    %93 = math.exp %92 : vector<8x128xf32>
    %cst_30 = arith.constant 1.000000e+00 : f32
    %94 = vector.broadcast %cst_30 : f32 to vector<8x128xf32>
    %95 = arith.addf %94, %93 : vector<8x128xf32>
    %96 = arith.divf %94, %95 : vector<8x128xf32>
    %97 = vector.extract_strided_slice %96 {offsets = [0, 0], sizes = [8, 32], strides = [1, 1]} : vector<8x128xf32> to vector<8x32xf32>
    %98 = vector.extract_strided_slice %96 {offsets = [0, 32], sizes = [8, 32], strides = [1, 1]} : vector<8x128xf32> to vector<8x32xf32>
    %99 = vector.extract_strided_slice %96 {offsets = [0, 64], sizes = [8, 32], strides = [1, 1]} : vector<8x128xf32> to vector<8x32xf32>
    %100 = vector.extract_strided_slice %96 {offsets = [0, 96], sizes = [8, 32], strides = [1, 1]} : vector<8x128xf32> to vector<8x32xf32>
    %101 = arith.mulf %98, %76 : vector<8x32xf32>
    %102 = arith.subf %99, %97 : vector<8x32xf32>
    %103 = arith.addf %101, %102 : vector<8x32xf32>
    %104 = arith.negf %103 : vector<8x32xf32>
    %105 = math.exp %104 : vector<8x32xf32>
    %cst_31 = arith.constant 1.000000e+00 : f32
    %106 = vector.broadcast %cst_31 : f32 to vector<8x32xf32>
    %107 = arith.addf %106, %105 : vector<8x32xf32>
    %108 = arith.divf %106, %107 : vector<8x32xf32>
    %109 = arith.subf %108, %100 : vector<8x32xf32>
    %110 = arith.index_cast %c3_i32 : i32 to index
    %c0_32 = arith.constant 0 : index
    %c0_33 = arith.constant 0 : index
    %111 = vector.load %arg4[%110, %c0_32, %c0_33] : memref<8x8x32xf32, #tpu.memory_space<vmem>>, vector<1x8x32xf32>
    %112 = vector.shape_cast %111 : vector<1x8x32xf32> to vector<8x32xf32>
    %113 = vector.shape_cast %109 : vector<8x32xf32> to vector<1x8x32xf32>
    tpu.vector_store %arg4[%110, %c0_32, %c0_33], %113 {strides = array<i32>} : memref<8x8x32xf32, #tpu.memory_space<vmem>>, vector<1x8x32xf32>,
    %c4_i32 = arith.constant 4 : i32
    %114 = arith.index_cast %c4_i32 : i32 to index
    %c0_34 = arith.constant 0 : index
    %c0_35 = arith.constant 0 : index
    %115 = vector.load %arg2[%114, %c0_34, %c0_35] : memref<8x8x128xf32, #tpu.memory_space<vmem>>, vector<1x8x128xf32>
    %116 = vector.shape_cast %115 : vector<1x8x128xf32> to vector<8x128xf32>
    %cst_36 = arith.constant dense<0.000000e+00> : vector<8x128xf32>
    %117 = tpu.matmul %109, %3, %cst_36 {dimension_numbers = #tpu.dot_dimension_numbers<[1], [0], [0], [1], [0, 0, 1, 1], [], []>} : vector<8x32xf32>, vector<32x128xf32>, vector<8x128xf32> -> vector<8x128xf32>
    %118 = arith.addf %116, %117 : vector<8x128xf32>
    %119 = arith.negf %118 : vector<8x128xf32>
    %120 = math.exp %119 : vector<8x128xf32>
    %cst_37 = arith.constant 1.000000e+00 : f32
    %121 = vector.broadcast %cst_37 : f32 to vector<8x128xf32>
    %122 = arith.addf %121, %120 : vector<8x128xf32>
    %123 = arith.divf %121, %122 : vector<8x128xf32>
    %124 = vector.extract_strided_slice %123 {offsets = [0, 0], sizes = [8, 32], strides = [1, 1]} : vector<8x128xf32> to vector<8x32xf32>
    %125 = vector.extract_strided_slice %123 {offsets = [0, 32], sizes = [8, 32], strides = [1, 1]} : vector<8x128xf32> to vector<8x32xf32>
    %126 = vector.extract_strided_slice %123 {offsets = [0, 64], sizes = [8, 32], strides = [1, 1]} : vector<8x128xf32> to vector<8x32xf32>
    %127 = vector.extract_strided_slice %123 {offsets = [0, 96], sizes = [8, 32], strides = [1, 1]} : vector<8x128xf32> to vector<8x32xf32>
    %128 = arith.mulf %125, %103 : vector<8x32xf32>
    %129 = arith.subf %126, %124 : vector<8x32xf32>
    %130 = arith.addf %128, %129 : vector<8x32xf32>
    %131 = arith.negf %130 : vector<8x32xf32>
    %132 = math.exp %131 : vector<8x32xf32>
    %cst_38 = arith.constant 1.000000e+00 : f32
    %133 = vector.broadcast %cst_38 : f32 to vector<8x32xf32>
    %134 = arith.addf %133, %132 : vector<8x32xf32>
    %135 = arith.divf %133, %134 : vector<8x32xf32>
    %136 = arith.subf %135, %127 : vector<8x32xf32>
    %137 = arith.index_cast %c4_i32 : i32 to index
    %c0_39 = arith.constant 0 : index
    %c0_40 = arith.constant 0 : index
    %138 = vector.load %arg4[%137, %c0_39, %c0_40] : memref<8x8x32xf32, #tpu.memory_space<vmem>>, vector<1x8x32xf32>
    %139 = vector.shape_cast %138 : vector<1x8x32xf32> to vector<8x32xf32>
    %140 = vector.shape_cast %136 : vector<8x32xf32> to vector<1x8x32xf32>
    tpu.vector_store %arg4[%137, %c0_39, %c0_40], %140 {strides = array<i32>} : memref<8x8x32xf32, #tpu.memory_space<vmem>>, vector<1x8x32xf32>,
    %c5_i32 = arith.constant 5 : i32
    %141 = arith.index_cast %c5_i32 : i32 to index
    %c0_41 = arith.constant 0 : index
    %c0_42 = arith.constant 0 : index
    %142 = vector.load %arg2[%141, %c0_41, %c0_42] : memref<8x8x128xf32, #tpu.memory_space<vmem>>, vector<1x8x128xf32>
    %143 = vector.shape_cast %142 : vector<1x8x128xf32> to vector<8x128xf32>
    %cst_43 = arith.constant dense<0.000000e+00> : vector<8x128xf32>
    %144 = tpu.matmul %136, %3, %cst_43 {dimension_numbers = #tpu.dot_dimension_numbers<[1], [0], [0], [1], [0, 0, 1, 1], [], []>} : vector<8x32xf32>, vector<32x128xf32>, vector<8x128xf32> -> vector<8x128xf32>
    %145 = arith.addf %143, %144 : vector<8x128xf32>
    %146 = arith.negf %145 : vector<8x128xf32>
    %147 = math.exp %146 : vector<8x128xf32>
    %cst_44 = arith.constant 1.000000e+00 : f32
    %148 = vector.broadcast %cst_44 : f32 to vector<8x128xf32>
    %149 = arith.addf %148, %147 : vector<8x128xf32>
    %150 = arith.divf %148, %149 : vector<8x128xf32>
    %151 = vector.extract_strided_slice %150 {offsets = [0, 0], sizes = [8, 32], strides = [1, 1]} : vector<8x128xf32> to vector<8x32xf32>
    %152 = vector.extract_strided_slice %150 {offsets = [0, 32], sizes = [8, 32], strides = [1, 1]} : vector<8x128xf32> to vector<8x32xf32>
    %153 = vector.extract_strided_slice %150 {offsets = [0, 64], sizes = [8, 32], strides = [1, 1]} : vector<8x128xf32> to vector<8x32xf32>
    %154 = vector.extract_strided_slice %150 {offsets = [0, 96], sizes = [8, 32], strides = [1, 1]} : vector<8x128xf32> to vector<8x32xf32>
    %155 = arith.mulf %152, %130 : vector<8x32xf32>
    %156 = arith.subf %153, %151 : vector<8x32xf32>
    %157 = arith.addf %155, %156 : vector<8x32xf32>
    %158 = arith.negf %157 : vector<8x32xf32>
    %159 = math.exp %158 : vector<8x32xf32>
    %cst_45 = arith.constant 1.000000e+00 : f32
    %160 = vector.broadcast %cst_45 : f32 to vector<8x32xf32>
    %161 = arith.addf %160, %159 : vector<8x32xf32>
    %162 = arith.divf %160, %161 : vector<8x32xf32>
    %163 = arith.subf %162, %154 : vector<8x32xf32>
    %164 = arith.index_cast %c5_i32 : i32 to index
    %c0_46 = arith.constant 0 : index
    %c0_47 = arith.constant 0 : index
    %165 = vector.load %arg4[%164, %c0_46, %c0_47] : memref<8x8x32xf32, #tpu.memory_space<vmem>>, vector<1x8x32xf32>
    %166 = vector.shape_cast %165 : vector<1x8x32xf32> to vector<8x32xf32>
    %167 = vector.shape_cast %163 : vector<8x32xf32> to vector<1x8x32xf32>
    tpu.vector_store %arg4[%164, %c0_46, %c0_47], %167 {strides = array<i32>} : memref<8x8x32xf32, #tpu.memory_space<vmem>>, vector<1x8x32xf32>,
    %c6_i32 = arith.constant 6 : i32
    %168 = arith.index_cast %c6_i32 : i32 to index
    %c0_48 = arith.constant 0 : index
    %c0_49 = arith.constant 0 : index
    %169 = vector.load %arg2[%168, %c0_48, %c0_49] : memref<8x8x128xf32, #tpu.memory_space<vmem>>, vector<1x8x128xf32>
    %170 = vector.shape_cast %169 : vector<1x8x128xf32> to vector<8x128xf32>
    %cst_50 = arith.constant dense<0.000000e+00> : vector<8x128xf32>
    %171 = tpu.matmul %163, %3, %cst_50 {dimension_numbers = #tpu.dot_dimension_numbers<[1], [0], [0], [1], [0, 0, 1, 1], [], []>} : vector<8x32xf32>, vector<32x128xf32>, vector<8x128xf32> -> vector<8x128xf32>
    %172 = arith.addf %170, %171 : vector<8x128xf32>
    %173 = arith.negf %172 : vector<8x128xf32>
    %174 = math.exp %173 : vector<8x128xf32>
    %cst_51 = arith.constant 1.000000e+00 : f32
    %175 = vector.broadcast %cst_51 : f32 to vector<8x128xf32>
    %176 = arith.addf %175, %174 : vector<8x128xf32>
    %177 = arith.divf %175, %176 : vector<8x128xf32>
    %178 = vector.extract_strided_slice %177 {offsets = [0, 0], sizes = [8, 32], strides = [1, 1]} : vector<8x128xf32> to vector<8x32xf32>
    %179 = vector.extract_strided_slice %177 {offsets = [0, 32], sizes = [8, 32], strides = [1, 1]} : vector<8x128xf32> to vector<8x32xf32>
    %180 = vector.extract_strided_slice %177 {offsets = [0, 64], sizes = [8, 32], strides = [1, 1]} : vector<8x128xf32> to vector<8x32xf32>
    %181 = vector.extract_strided_slice %177 {offsets = [0, 96], sizes = [8, 32], strides = [1, 1]} : vector<8x128xf32> to vector<8x32xf32>
    %182 = arith.mulf %179, %157 : vector<8x32xf32>
    %183 = arith.subf %180, %178 : vector<8x32xf32>
    %184 = arith.addf %182, %183 : vector<8x32xf32>
    %185 = arith.negf %184 : vector<8x32xf32>
    %186 = math.exp %185 : vector<8x32xf32>
    %cst_52 = arith.constant 1.000000e+00 : f32
    %187 = vector.broadcast %cst_52 : f32 to vector<8x32xf32>
    %188 = arith.addf %187, %186 : vector<8x32xf32>
    %189 = arith.divf %187, %188 : vector<8x32xf32>
    %190 = arith.subf %189, %181 : vector<8x32xf32>
    %191 = arith.index_cast %c6_i32 : i32 to index
    %c0_53 = arith.constant 0 : index
    %c0_54 = arith.constant 0 : index
    %192 = vector.load %arg4[%191, %c0_53, %c0_54] : memref<8x8x32xf32, #tpu.memory_space<vmem>>, vector<1x8x32xf32>
    %193 = vector.shape_cast %192 : vector<1x8x32xf32> to vector<8x32xf32>
    %194 = vector.shape_cast %190 : vector<8x32xf32> to vector<1x8x32xf32>
    tpu.vector_store %arg4[%191, %c0_53, %c0_54], %194 {strides = array<i32>} : memref<8x8x32xf32, #tpu.memory_space<vmem>>, vector<1x8x32xf32>,
    %c7_i32 = arith.constant 7 : i32
    %195 = arith.index_cast %c7_i32 : i32 to index
    %c0_55 = arith.constant 0 : index
    %c0_56 = arith.constant 0 : index
    %196 = vector.load %arg2[%195, %c0_55, %c0_56] : memref<8x8x128xf32, #tpu.memory_space<vmem>>, vector<1x8x128xf32>
    %197 = vector.shape_cast %196 : vector<1x8x128xf32> to vector<8x128xf32>
    %cst_57 = arith.constant dense<0.000000e+00> : vector<8x128xf32>
    %198 = tpu.matmul %190, %3, %cst_57 {dimension_numbers = #tpu.dot_dimension_numbers<[1], [0], [0], [1], [0, 0, 1, 1], [], []>} : vector<8x32xf32>, vector<32x128xf32>, vector<8x128xf32> -> vector<8x128xf32>
    %199 = arith.addf %197, %198 : vector<8x128xf32>
    %200 = arith.negf %199 : vector<8x128xf32>
    %201 = math.exp %200 : vector<8x128xf32>
    %cst_58 = arith.constant 1.000000e+00 : f32
    %202 = vector.broadcast %cst_58 : f32 to vector<8x128xf32>
    %203 = arith.addf %202, %201 : vector<8x128xf32>
    %204 = arith.divf %202, %203 : vector<8x128xf32>
    %205 = vector.extract_strided_slice %204 {offsets = [0, 0], sizes = [8, 32], strides = [1, 1]} : vector<8x128xf32> to vector<8x32xf32>
    %206 = vector.extract_strided_slice %204 {offsets = [0, 32], sizes = [8, 32], strides = [1, 1]} : vector<8x128xf32> to vector<8x32xf32>
    %207 = vector.extract_strided_slice %204 {offsets = [0, 64], sizes = [8, 32], strides = [1, 1]} : vector<8x128xf32> to vector<8x32xf32>
    %208 = vector.extract_strided_slice %204 {offsets = [0, 96], sizes = [8, 32], strides = [1, 1]} : vector<8x128xf32> to vector<8x32xf32>
    %209 = arith.mulf %206, %184 : vector<8x32xf32>
    %210 = arith.subf %207, %205 : vector<8x32xf32>
    %211 = arith.addf %209, %210 : vector<8x32xf32>
    %212 = arith.negf %211 : vector<8x32xf32>
    %213 = math.exp %212 : vector<8x32xf32>
    %cst_59 = arith.constant 1.000000e+00 : f32
    %214 = vector.broadcast %cst_59 : f32 to vector<8x32xf32>
    %215 = arith.addf %214, %213 : vector<8x32xf32>
    %216 = arith.divf %214, %215 : vector<8x32xf32>
    %217 = arith.subf %216, %208 : vector<8x32xf32>
    %218 = arith.index_cast %c7_i32 : i32 to index
    %c0_60 = arith.constant 0 : index
    %c0_61 = arith.constant 0 : index
    %219 = vector.load %arg4[%218, %c0_60, %c0_61] : memref<8x8x32xf32, #tpu.memory_space<vmem>>, vector<1x8x32xf32>
    %220 = vector.shape_cast %219 : vector<1x8x32xf32> to vector<8x32xf32>
    %221 = vector.shape_cast %217 : vector<8x32xf32> to vector<1x8x32xf32>
    tpu.vector_store %arg4[%218, %c0_60, %c0_61], %221 {strides = array<i32>} : memref<8x8x32xf32, #tpu.memory_space<vmem>>, vector<1x8x32xf32>,
    %c8_i32 = arith.constant 8 : i32
    %c0_62 = arith.constant 0 : index
    %c0_63 = arith.constant 0 : index
    %222 = vector.load %arg6[%c0_62, %c0_63] : memref<8x32xf32, #tpu.memory_space<vmem>>, vector<8x32xf32>
    tpu.vector_store %arg6[%c0_62, %c0_63], %217 {strides = array<i32>} : memref<8x32xf32, #tpu.memory_space<vmem>>, vector<8x32xf32>,
    %c0_64 = arith.constant 0 : index
    %c0_65 = arith.constant 0 : index
    %223 = vector.load %arg7[%c0_64, %c0_65] : memref<8x32xf32, #tpu.memory_space<vmem>>, vector<8x32xf32>
    tpu.vector_store %arg7[%c0_64, %c0_65], %211 {strides = array<i32>} : memref<8x32xf32, #tpu.memory_space<vmem>>, vector<8x32xf32>,
    %c0_i32_66 = arith.constant 0 : i32
    %224 = arith.cmpi eq, %arg1, %c0_i32_66 : i32
    %225 = arith.extui %224 : i1 to i32
    %c0_i32_67 = arith.constant 0 : i32
    %226 = arith.cmpi ne, %225, %c0_i32_67 : i32
    scf.if %226 {
      %c0_68 = arith.constant 0 : index
      %c0_69 = arith.constant 0 : index
      %227 = vector.load %arg5[%c0_68, %c0_69] : memref<8x32xf32, #tpu.memory_space<vmem>>, vector<8x32xf32>
      tpu.vector_store %arg5[%c0_68, %c0_69], %211 {strides = array<i32>} : memref<8x32xf32, #tpu.memory_space<vmem>>, vector<8x32xf32>,
    } else {
    }
    return
  }
  func.func @transform_0(%arg0: i32, %arg1: i32) -> (i32, i32, i32) {
    %c0_i32 = arith.constant 0 : i32
    %c0_i32_0 = arith.constant 0 : i32
    return %arg1, %arg0, %c0_i32 : i32, i32, i32
  }
  func.func @transform_1(%arg0: i32, %arg1: i32) -> (i32, i32) {
    %c0_i32 = arith.constant 0 : i32
    %c0_i32_0 = arith.constant 0 : i32
    %c0_i32_1 = arith.constant 0 : i32
    return %c0_i32, %c0_i32_0 : i32, i32
  }
  func.func @transform_2(%arg0: i32, %arg1: i32) -> (i32, i32, i32) {
    %c0_i32 = arith.constant 0 : i32
    %c0_i32_0 = arith.constant 0 : i32
    return %arg1, %arg0, %c0_i32 : i32, i32, i32
  }
  func.func @transform_3(%arg0: i32, %arg1: i32) -> (i32, i32) {
    %c0_i32 = arith.constant 0 : i32
    %c0_i32_0 = arith.constant 0 : i32
    return %arg0, %c0_i32 : i32, i32
  }
}

</mosaic_0001>

<llo_original>
// kernel: sublstm_forward.1
$region0: #{sublstm_forward.1}
  #allocation0 [shape = 'u32[]', space=smem, size = 0x4, offset = 0x4, fixed_abs, tag = 'smem constant byte address 0x4 - core index']
  #allocation1 [shape = 'u32[72,128]{1,0:T(1,128)}', space=vmem, size = 0x9000, scoped, tag = 'internal scratch']
  #allocation2 [shape = 'f32[8,32]{1,0:T(8,128)}', space=vmem, size = 0x1000, scoped, tag = 'scratch operand']
  #allocation3 [shape = 'f32[8,32]{1,0:T(8,128)}', space=vmem, size = 0x1000, scoped, tag = 'scratch operand']
  %s0 = inlined_call_operand.vmem [shape: f32[8,8,128], index: 0, kind: input, shape index: {}]
  %s1 = inlined_call_operand.vmem [shape: f32[32,128], index: 1, kind: input, shape index: {}]
  %s2 = inlined_call_operand.vmem [shape: f32[8,8,32], index: 2, kind: output, shape index: {0}]
  %s3 = inlined_call_operand.vmem [shape: f32[8,32], index: 3, kind: output, shape index: {1}]
  %4 = xla_tuple %s2, %s3
  %s5 = sld [smem:[#allocation0]]
  $region34: #{sublstm_forward.1} parent=0
    _
  %s7 = ssub.s32 1, %s5
  %s8 = scalar_select 0, %s7, %s5
  // Predicated region
  $region2: #{sublstm_forward.1} parent=0 // pred_check
    _
  $region3: #{sublstm_forward.1} parent=0 // pred_check_branch
    %10 = sbr.rel (0) target = $region5
  $region4: #{sublstm_forward.1} parent=0 // pred_region
    _
  $region5: #{sublstm_forward.1} parent=0 // pred_fallthru
    _
  // Predicated region
  $region6: #{sublstm_forward.1} parent=0 // pred_check
    _
  $region7: #{sublstm_forward.1} parent=0 // pred_check_branch
    %12 = sbr.rel (0) target = $region9
  $region8: #{sublstm_forward.1} parent=0 // pred_region
    _
  $region9: #{sublstm_forward.1} parent=0 // pred_fallthru
    _
  %p13 = scmp.eq.s32.totalorder 0, 0
  // Predicated region
  $region10: #{sublstm_forward.1} parent=0 // pred_check
    %p14 = pneg %p13
  $region11: #{sublstm_forward.1} parent=0 // pred_check_branch
    %16 = sbr.rel (%p14) target = $region13
  $region12: #{sublstm_forward.1} parent=0 // pred_region
    %vm17 = vcmask 261120
    %18 = vst.msk [vmem:[#allocation2] sm:$0xff] %vm17, 0.0
    %19 = vst.msk [vmem:[#allocation3] sm:$0xff] %vm17, 0.0
  $region13: #{sublstm_forward.1} parent=0 // pred_fallthru
    _
  %v20 = vld [vmem:[%s1] sm:$0xff]
  %v21 = vld [vmem:[%s1 + $0x8] sm:$0xff]
  %v22 = vld [vmem:[%s1 + $0x10] sm:$0xff]
  %v23 = vld [vmem:[%s1 + $0x18] sm:$0xff]
  %v24 = vld [vmem:[#allocation2] sm:$0xff]
  %v25 = vld [vmem:[#allocation3] sm:$0xff]
  %v26 = vld [vmem:[%s0] sm:$0xff]
  %vm27 = vcmask 261120
  %v29 = vsel %vm27, %v24, 0
  %31 = vmatpush.msra.mxu0 0.0
  %32 = vmatpush.msra.mxu0 0.0
  %33 = vmatpush.msra.mxu0 0.0
  %34 = vmatpush.msra.mxu0 0.0
  %35 = vmatpush.msra.mxu0 0.0
  %36 = vmatpush.msra.mxu0 0.0
  %37 = vmatpush.msra.mxu0 0.0
  %38 = vmatpush.msra.mxu0 0.0
  %39 = vmatpush.msra.mxu0 0.0
  %40 = vmatpush.msra.mxu0 0.0
  %41 = vmatpush.msra.mxu0 0.0
  %42 = vmatpush.msra.mxu0 0.0
  %43 = vmatpush.msra.mxu0 %v23
  %44 = vmatpush.msra.mxu0 %v22
  %45 = vmatpush.msra.mxu0 %v21
  %46 = vmatpush.msra.mxu0 %v20
  %47 = vmatmul.f32.gmra.mxu0 %v29
  %v48 = vpop.f32.mrf.mxu0
  %v49 = vadd.f32 0.0, %v48
  %50 = vdwg.mxu0
  %v51 = vadd.f32 %v26, %v49
  %v52 = vxor.u32 %v51, 2147483648
  %v53 = vmul.f32 %v52, 1.442695
  %v54 = vpow.pop %v53
  %v55 = vadd.f32 %v54, 1.0
  %v56 = vrcp.pop %v55
  %v57 = vmul.f32 %v55, %v56
  %v58 = vsub.f32 1.0, %v57
  %v59 = vmul.f32 %v56, %v58
  %v60 = vadd.f32 %v56, %v59
  %vm61 = vweird.f32 %v55
  %vm62 = vweird.f32 %v56
  %vm63 = vmor %vm61, %vm62
  %v64 = vsel %vm63, %v56, %v60
  %v65 = vand.u32 2147483647, %v55
  %vm66 = vcmp.eq.f32.partialorder %v65, 8.507059e+37
  %v67 = vand.u32 %v55, 2147483648
  %v68 = vor.u32 1.1754944e-38, %v67
  %v69 = vsel %vm66, %v68, %v64
  %v70 = vmul.f32 1.0, %v69
  %72 = vrot.lane.b32.xlu0 %v25, 32
  %v73 = vpop.permute.xlu0 %72
  %v75 = vmul.f32 %v70, %v73
  %77 = vrot.lane.b32.xlu0 %v70, 64
  %v78 = vpop.permute.xlu0 %77
  %v80 = vsub.f32 %v70, %v78
  %82 = vrot.lane.b32.xlu0 %v80, 96
  %v83 = vpop.permute.xlu0 %82
  %v85 = vadd.f32 %v75, %v83
  %v86 = vxor.u32 %v85, 2147483648
  %v87 = vmul.f32 %v86, 1.442695
  %v88 = vpow.pop %v87
  %v89 = vadd.f32 %v88, 1.0
  %v90 = vrcp.pop %v89
  %v91 = vmul.f32 %v89, %v90
  %v92 = vsub.f32 1.0, %v91
  %v93 = vmul.f32 %v90, %v92
  %v94 = vadd.f32 %v90, %v93
  %vm95 = vweird.f32 %v89
  %vm96 = vweird.f32 %v90
  %vm97 = vmor %vm95, %vm96
  %v98 = vsel %vm97, %v90, %v94
  %v99 = vand.u32 2147483647, %v89
  %vm100 = vcmp.eq.f32.partialorder %v99, 8.507059e+37
  %v101 = vand.u32 %v89, 2147483648
  %v102 = vor.u32 1.1754944e-38, %v101
  %v103 = vsel %vm100, %v102, %v98
  %v104 = vmul.f32 1.0, %v103
  %v105 = vsub.f32 %v104, %v78
  %107 = vrot.lane.b32.xlu0 %v105, 96
  %v108 = vpop.permute.xlu0 %107
  %110 = vst.msk [vmem:[%s2] sm:$0xff] %vm27, %v108
  %s111 = scalar_lea.vmem %s0, 8
  %v112 = vld [vmem:[%s111] sm:$0xff]
  %v113 = vsel %vm27, %v108, 0
  %115 = vmatpush.msra.mxu0 0.0
  %116 = vmatpush.msra.mxu0 0.0
  %117 = vmatpush.msra.mxu0 0.0
  %118 = vmatpush.msra.mxu0 0.0
  %119 = vmatpush.msra.mxu0 0.0
  %120 = vmatpush.msra.mxu0 0.0
  %121 = vmatpush.msra.mxu0 0.0
  %122 = vmatpush.msra.mxu0 0.0
  %123 = vmatpush.msra.mxu0 0.0
  %124 = vmatpush.msra.mxu0 0.0
  %125 = vmatpush.msra.mxu0 0.0
  %126 = vmatpush.msra.mxu0 0.0
  %127 = vmatpush.msra.mxu0 %v23
  %128 = vmatpush.msra.mxu0 %v22
  %129 = vmatpush.msra.mxu0 %v21
  %130 = vmatpush.msra.mxu0 %v20
  %131 = vmatmul.f32.gmra.mxu0 %v113
  %v132 = vpop.f32.mrf.mxu0
  %v133 = vadd.f32 0.0, %v132
  %134 = vdwg.mxu0
  %v135 = vadd.f32 %v112, %v133
  %v136 = vxor.u32 %v135, 2147483648
  %v137 = vmul.f32 %v136, 1.442695
  %v138 = vpow.pop %v137
  %v139 = vadd.f32 %v138, 1.0
  %v140 = vrcp.pop %v139
  %v141 = vmul.f32 %v139, %v140
  %v142 = vsub.f32 1.0, %v141
  %v143 = vmul.f32 %v140, %v142
  %v144 = vadd.f32 %v140, %v143
  %vm145 = vweird.f32 %v139
  %vm146 = vweird.f32 %v140
  %vm147 = vmor %vm145, %vm146
  %v148 = vsel %vm147, %v140, %v144
  %v149 = vand.u32 2147483647, %v139
  %vm150 = vcmp.eq.f32.partialorder %v149, 8.507059e+37
  %v151 = vand.u32 %v139, 2147483648
  %v152 = vor.u32 1.1754944e-38, %v151
  %v153 = vsel %vm150, %v152, %v148
  %v154 = vmul.f32 1.0, %v153
  %v155 = vmul.f32 %v154, %v85
  %157 = vrot.lane.b32.xlu0 %v154, 64
  %v158 = vpop.permute.xlu0 %157
  %v160 = vsub.f32 %v154, %v158
  %162 = vrot.lane.b32.xlu0 %v160, 96
  %v163 = vpop.permute.xlu0 %162
  %v165 = vadd.f32 %v155, %v163
  %v166 = vxor.u32 %v165, 2147483648
  %v167 = vmul.f32 %v166, 1.442695
  %v168 = vpow.pop %v167
  %v169 = vadd.f32 %v168, 1.0
  %v170 = vrcp.pop %v169
  %v171 = vmul.f32 %v169, %v170
  %v172 = vsub.f32 1.0, %v171
  %v173 = vmul.f32 %v170, %v172
  %v174 = vadd.f32 %v170, %v173
  %vm175 = vweird.f32 %v169
  %vm176 = vweird.f32 %v170
  %vm177 = vmor %vm175, %vm176
  %v178 = vsel %vm177, %v170, %v174
  %v179 = vand.u32 2147483647, %v169
  %vm180 = vcmp.eq.f32.partialorder %v179, 8.507059e+37
  %v181 = vand.u32 %v169, 2147483648
  %v182 = vor.u32 1.1754944e-38, %v181
  %v183 = vsel %vm180, %v182, %v178
  %v184 = vmul.f32 1.0, %v183
  %v185 = vsub.f32 %v184, %v158
  %187 = vrot.lane.b32.xlu0 %v185, 96
  %v188 = vpop.permute.xlu0 %187
  %s190 = scalar_lea.vmem %s2, 8
  %191 = vst.msk [vmem:[%s190] sm:$0xff] %vm27, %v188
  %s192 = scalar_lea.vmem %s0, 16
  %v193 = vld [vmem:[%s192] sm:$0xff]
  %v194 = vsel %vm27, %v188, 0
  %196 = vmatpush.msra.mxu0 0.0
  %197 = vmatpush.msra.mxu0 0.0
  %198 = vmatpush.msra.mxu0 0.0
  %199 = vmatpush.msra.mxu0 0.0
  %200 = vmatpush.msra.mxu0 0.0
  %201 = vmatpush.msra.mxu0 0.0
  %202 = vmatpush.msra.mxu0 0.0
  %203 = vmatpush.msra.mxu0 0.0
  %204 = vmatpush.msra.mxu0 0.0
  %205 = vmatpush.msra.mxu0 0.0
  %206 = vmatpush.msra.mxu0 0.0
  %207 = vmatpush.msra.mxu0 0.0
  %208 = vmatpush.msra.mxu0 %v23
  %209 = vmatpush.msra.mxu0 %v22
  %210 = vmatpush.msra.mxu0 %v21
  %211 = vmatpush.msra.mxu0 %v20
  %212 = vmatmul.f32.gmra.mxu0 %v194
  %v213 = vpop.f32.mrf.mxu0
  %v214 = vadd.f32 0.0, %v213
  %215 = vdwg.mxu0
  %v216 = vadd.f32 %v193, %v214
  %v217 = vxor.u32 %v216, 2147483648
  %v218 = vmul.f32 %v217, 1.442695
  %v219 = vpow.pop %v218
  %v220 = vadd.f32 %v219, 1.0
  %v221 = vrcp.pop %v220
  %v222 = vmul.f32 %v220, %v221
  %v223 = vsub.f32 1.0, %v222
  %v224 = vmul.f32 %v221, %v223
  %v225 = vadd.f32 %v221, %v224
  %vm226 = vweird.f32 %v220
  %vm227 = vweird.f32 %v221
  %vm228 = vmor %vm226, %vm227
  %v229 = vsel %vm228, %v221, %v225
  %v230 = vand.u32 2147483647, %v220
  %vm231 = vcmp.eq.f32.partialorder %v230, 8.507059e+37
  %v232 = vand.u32 %v220, 2147483648
  %v233 = vor.u32 1.1754944e-38, %v232
  %v234 = vsel %vm231, %v233, %v229
  %v235 = vmul.f32 1.0, %v234
  %v236 = vmul.f32 %v235, %v165
  %238 = vrot.lane.b32.xlu0 %v235, 64
  %v239 = vpop.permute.xlu0 %238
  %v241 = vsub.f32 %v235, %v239
  %243 = vrot.lane.b32.xlu0 %v241, 96
  %v244 = vpop.permute.xlu0 %243
  %v246 = vadd.f32 %v236, %v244
  %v247 = vxor.u32 %v246, 2147483648
  %v248 = vmul.f32 %v247, 1.442695
  %v249 = vpow.pop %v248
  %v250 = vadd.f32 %v249, 1.0
  %v251 = vrcp.pop %v250
  %v252 = vmul.f32 %v250, %v251
  %v253 = vsub.f32 1.0, %v252
  %v254 = vmul.f32 %v251, %v253
  %v255 = vadd.f32 %v251, %v254
  %vm256 = vweird.f32 %v250
  %vm257 = vweird.f32 %v251
  %vm258 = vmor %vm256, %vm257
  %v259 = vsel %vm258, %v251, %v255
  %v260 = vand.u32 2147483647, %v250
  %vm261 = vcmp.eq.f32.partialorder %v260, 8.507059e+37
  %v262 = vand.u32 %v250, 2147483648
  %v263 = vor.u32 1.1754944e-38, %v262
  %v264 = vsel %vm261, %v263, %v259
  %v265 = vmul.f32 1.0, %v264
  %v266 = vsub.f32 %v265, %v239
  %268 = vrot.lane.b32.xlu0 %v266, 96
  %v269 = vpop.permute.xlu0 %268
  %s271 = scalar_lea.vmem %s2, 16
  %272 = vst.msk [vmem:[%s271] sm:$0xff] %vm27, %v269
  %s273 = scalar_lea.vmem %s0, 24
  %v274 = vld [vmem:[%s273] sm:$0xff]
  %v275 = vsel %vm27, %v269, 0
  %277 = vmatpush.msra.mxu0 0.0
  %278 = vmatpush.msra.mxu0 0.0
  %279 = vmatpush.msra.mxu0 0.0
  %280 = vmatpush.msra.mxu0 0.0
  %281 = vmatpush.msra.mxu0 0.0
  %282 = vmatpush.msra.mxu0 0.0
  %283 = vmatpush.msra.mxu0 0.0
  %284 = vmatpush.msra.mxu0 0.0
  %285 = vmatpush.msra.mxu0 0.0
  %286 = vmatpush.msra.mxu0 0.0
  %287 = vmatpush.msra.mxu0 0.0
  %288 = vmatpush.msra.mxu0 0.0
  %289 = vmatpush.msra.mxu0 %v23
  %290 = vmatpush.msra.mxu0 %v22
  %291 = vmatpush.msra.mxu0 %v21
  %292 = vmatpush.msra.mxu0 %v20
  %293 = vmatmul.f32.gmra.mxu0 %v275
  %v294 = vpop.f32.mrf.mxu0
  %v295 = vadd.f32 0.0, %v294
  %296 = vdwg.mxu0
  %v297 = vadd.f32 %v274, %v295
  %v298 = vxor.u32 %v297, 2147483648
  %v299 = vmul.f32 %v298, 1.442695
  %v300 = vpow.pop %v299
  %v301 = vadd.f32 %v300, 1.0
  %v302 = vrcp.pop %v301
  %v303 = vmul.f32 %v301, %v302
  %v304 = vsub.f32 1.0, %v303
  %v305 = vmul.f32 %v302, %v304
  %v306 = vadd.f32 %v302, %v305
  %vm307 = vweird.f32 %v301
  %vm308 = vweird.f32 %v302
  %vm309 = vmor %vm307, %vm308
  %v310 = vsel %vm309, %v302, %v306
  %v311 = vand.u32 2147483647, %v301
  %vm312 = vcmp.eq.f32.partialorder %v311, 8.507059e+37
  %v313 = vand.u32 %v301, 2147483648
  %v314 = vor.u32 1.1754944e-38, %v313
  %v315 = vsel %vm312, %v314, %v310
  %v316 = vmul.f32 1.0, %v315
  %v317 = vmul.f32 %v316, %v246
  %319 = vrot.lane.b32.xlu0 %v316, 64
  %v320 = vpop.permute.xlu0 %319
  %v322 = vsub.f32 %v316, %v320
  %324 = vrot.lane.b32.xlu0 %v322, 96
  %v325 = vpop.permute.xlu0 %324
  %v327 = vadd.f32 %v317, %v325
  %v328 = vxor.u32 %v327, 2147483648
  %v329 = vmul.f32 %v328, 1.442695
  %v330 = vpow.pop %v329
  %v331 = vadd.f32 %v330, 1.0
  %v332 = vrcp.pop %v331
  %v333 = vmul.f32 %v331, %v332
  %v334 = vsub.f32 1.0, %v333
  %v335 = vmul.f32 %v332, %v334
  %v336 = vadd.f32 %v332, %v335
  %vm337 = vweird.f32 %v331
  %vm338 = vweird.f32 %v332
  %vm339 = vmor %vm337, %vm338
  %v340 = vsel %vm339, %v332, %v336
  %v341 = vand.u32 2147483647, %v331
  %vm342 = vcmp.eq.f32.partialorder %v341, 8.507059e+37
  %v343 = vand.u32 %v331, 2147483648
  %v344 = vor.u32 1.1754944e-38, %v343
  %v345 = vsel %vm342, %v344, %v340
  %v346 = vmul.f32 1.0, %v345
  %v347 = vsub.f32 %v346, %v320
  %349 = vrot.lane.b32.xlu0 %v347, 96
  %v350 = vpop.permute.xlu0 %349
  %s352 = scalar_lea.vmem %s2, 24
  %353 = vst.msk [vmem:[%s352] sm:$0xff] %vm27, %v350
  %s354 = scalar_lea.vmem %s0, 32
  %v355 = vld [vmem:[%s354] sm:$0xff]
  %v356 = vsel %vm27, %v350, 0
  %358 = vmatpush.msra.mxu0 0.0
  %359 = vmatpush.msra.mxu0 0.0
  %360 = vmatpush.msra.mxu0 0.0
  %361 = vmatpush.msra.mxu0 0.0
  %362 = vmatpush.msra.mxu0 0.0
  %363 = vmatpush.msra.mxu0 0.0
  %364 = vmatpush.msra.mxu0 0.0
  %365 = vmatpush.msra.mxu0 0.0
  %366 = vmatpush.msra.mxu0 0.0
  %367 = vmatpush.msra.mxu0 0.0
  %368 = vmatpush.msra.mxu0 0.0
  %369 = vmatpush.msra.mxu0 0.0
  %370 = vmatpush.msra.mxu0 %v23
  %371 = vmatpush.msra.mxu0 %v22
  %372 = vmatpush.msra.mxu0 %v21
  %373 = vmatpush.msra.mxu0 %v20
  %374 = vmatmul.f32.gmra.mxu0 %v356
  %v375 = vpop.f32.mrf.mxu0
  %v376 = vadd.f32 0.0, %v375
  %377 = vdwg.mxu0
  %v378 = vadd.f32 %v355, %v376
  %v379 = vxor.u32 %v378, 2147483648
  %v380 = vmul.f32 %v379, 1.442695
  %v381 = vpow.pop %v380
  %v382 = vadd.f32 %v381, 1.0
  %v383 = vrcp.pop %v382
  %v384 = vmul.f32 %v382, %v383
  %v385 = vsub.f32 1.0, %v384
  %v386 = vmul.f32 %v383, %v385
  %v387 = vadd.f32 %v383, %v386
  %vm388 = vweird.f32 %v382
  %vm389 = vweird.f32 %v383
  %vm390 = vmor %vm388, %vm389
  %v391 = vsel %vm390, %v383, %v387
  %v392 = vand.u32 2147483647, %v382
  %vm393 = vcmp.eq.f32.partialorder %v392, 8.507059e+37
  %v394 = vand.u32 %v382, 2147483648
  %v395 = vor.u32 1.1754944e-38, %v394
  %v396 = vsel %vm393, %v395, %v391
  %v397 = vmul.f32 1.0, %v396
  %v398 = vmul.f32 %v397, %v327
  %400 = vrot.lane.b32.xlu0 %v397, 64
  %v401 = vpop.permute.xlu0 %400
  %v403 = vsub.f32 %v397, %v401
  %405 = vrot.lane.b32.xlu0 %v403, 96
  %v406 = vpop.permute.xlu0 %405
  %v408 = vadd.f32 %v398, %v406
  %v409 = vxor.u32 %v408, 2147483648
  %v410 = vmul.f32 %v409, 1.442695
  %v411 = vpow.pop %v410
  %v412 = vadd.f32 %v411, 1.0
  %v413 = vrcp.pop %v412
  %v414 = vmul.f32 %v412, %v413
  %v415 = vsub.f32 1.0, %v414
  %v416 = vmul.f32 %v413, %v415
  %v417 = vadd.f32 %v413, %v416
  %vm418 = vweird.f32 %v412
  %vm419 = vweird.f32 %v413
  %vm420 = vmor %vm418, %vm419
  %v421 = vsel %vm420, %v413, %v417
  %v422 = vand.u32 2147483647, %v412
  %vm423 = vcmp.eq.f32.partialorder %v422, 8.507059e+37
  %v424 = vand.u32 %v412, 2147483648
  %v425 = vor.u32 1.1754944e-38, %v424
  %v426 = vsel %vm423, %v425, %v421
  %v427 = vmul.f32 1.0, %v426
  %v428 = vsub.f32 %v427, %v401
  %430 = vrot.lane.b32.xlu0 %v428, 96
  %v431 = vpop.permute.xlu0 %430
  %s433 = scalar_lea.vmem %s2, 32
  %434 = vst.msk [vmem:[%s433] sm:$0xff] %vm27, %v431
  %s435 = scalar_lea.vmem %s0, 40
  %v436 = vld [vmem:[%s435] sm:$0xff]
  %v437 = vsel %vm27, %v431, 0
  %439 = vmatpush.msra.mxu0 0.0
  %440 = vmatpush.msra.mxu0 0.0
  %441 = vmatpush.msra.mxu0 0.0
  %442 = vmatpush.msra.mxu0 0.0
  %443 = vmatpush.msra.mxu0 0.0
  %444 = vmatpush.msra.mxu0 0.0
  %445 = vmatpush.msra.mxu0 0.0
  %446 = vmatpush.msra.mxu0 0.0
  %447 = vmatpush.msra.mxu0 0.0
  %448 = vmatpush.msra.mxu0 0.0
  %449 = vmatpush.msra.mxu0 0.0
  %450 = vmatpush.msra.mxu0 0.0
  %451 = vmatpush.msra.mxu0 %v23
  %452 = vmatpush.msra.mxu0 %v22
  %453 = vmatpush.msra.mxu0 %v21
  %454 = vmatpush.msra.mxu0 %v20
  %455 = vmatmul.f32.gmra.mxu0 %v437
  %v456 = vpop.f32.mrf.mxu0
  %v457 = vadd.f32 0.0, %v456
  %458 = vdwg.mxu0
  %v459 = vadd.f32 %v436, %v457
  %v460 = vxor.u32 %v459, 2147483648
  %v461 = vmul.f32 %v460, 1.442695
  %v462 = vpow.pop %v461
  %v463 = vadd.f32 %v462, 1.0
  %v464 = vrcp.pop %v463
  %v465 = vmul.f32 %v463, %v464
  %v466 = vsub.f32 1.0, %v465
  %v467 = vmul.f32 %v464, %v466
  %v468 = vadd.f32 %v464, %v467
  %vm469 = vweird.f32 %v463
  %vm470 = vweird.f32 %v464
  %vm471 = vmor %vm469, %vm470
  %v472 = vsel %vm471, %v464, %v468
  %v473 = vand.u32 2147483647, %v463
  %vm474 = vcmp.eq.f32.partialorder %v473, 8.507059e+37
  %v475 = vand.u32 %v463, 2147483648
  %v476 = vor.u32 1.1754944e-38, %v475
  %v477 = vsel %vm474, %v476, %v472
  %v478 = vmul.f32 1.0, %v477
  %v479 = vmul.f32 %v478, %v408
  %481 = vrot.lane.b32.xlu0 %v478, 64
  %v482 = vpop.permute.xlu0 %481
  %v484 = vsub.f32 %v478, %v482
  %486 = vrot.lane.b32.xlu0 %v484, 96
  %v487 = vpop.permute.xlu0 %486
  %v489 = vadd.f32 %v479, %v487
  %v490 = vxor.u32 %v489, 2147483648
  %v491 = vmul.f32 %v490, 1.442695
  %v492 = vpow.pop %v491
  %v493 = vadd.f32 %v492, 1.0
  %v494 = vrcp.pop %v493
  %v495 = vmul.f32 %v493, %v494
  %v496 = vsub.f32 1.0, %v495
  %v497 = vmul.f32 %v494, %v496
  %v498 = vadd.f32 %v494, %v497
  %vm499 = vweird.f32 %v493
  %vm500 = vweird.f32 %v494
  %vm501 = vmor %vm499, %vm500
  %v502 = vsel %vm501, %v494, %v498
  %v503 = vand.u32 2147483647, %v493
  %vm504 = vcmp.eq.f32.partialorder %v503, 8.507059e+37
  %v505 = vand.u32 %v493, 2147483648
  %v506 = vor.u32 1.1754944e-38, %v505
  %v507 = vsel %vm504, %v506, %v502
  %v508 = vmul.f32 1.0, %v507
  %v509 = vsub.f32 %v508, %v482
  %511 = vrot.lane.b32.xlu0 %v509, 96
  %v512 = vpop.permute.xlu0 %511
  %s514 = scalar_lea.vmem %s2, 40
  %515 = vst.msk [vmem:[%s514] sm:$0xff] %vm27, %v512
  %s516 = scalar_lea.vmem %s0, 48
  %v517 = vld [vmem:[%s516] sm:$0xff]
  %v518 = vsel %vm27, %v512, 0
  %520 = vmatpush.msra.mxu0 0.0
  %521 = vmatpush.msra.mxu0 0.0
  %522 = vmatpush.msra.mxu0 0.0
  %523 = vmatpush.msra.mxu0 0.0
  %524 = vmatpush.msra.mxu0 0.0
  %525 = vmatpush.msra.mxu0 0.0
  %526 = vmatpush.msra.mxu0 0.0
  %527 = vmatpush.msra.mxu0 0.0
  %528 = vmatpush.msra.mxu0 0.0
  %529 = vmatpush.msra.mxu0 0.0
  %530 = vmatpush.msra.mxu0 0.0
  %531 = vmatpush.msra.mxu0 0.0
  %532 = vmatpush.msra.mxu0 %v23
  %533 = vmatpush.msra.mxu0 %v22
  %534 = vmatpush.msra.mxu0 %v21
  %535 = vmatpush.msra.mxu0 %v20
  %536 = vmatmul.f32.gmra.mxu0 %v518
  %v537 = vpop.f32.mrf.mxu0
  %v538 = vadd.f32 0.0, %v537
  %539 = vdwg.mxu0
  %v540 = vadd.f32 %v517, %v538
  %v541 = vxor.u32 %v540, 2147483648
  %v542 = vmul.f32 %v541, 1.442695
  %v543 = vpow.pop %v542
  %v544 = vadd.f32 %v543, 1.0
  %v545 = vrcp.pop %v544
  %v546 = vmul.f32 %v544, %v545
  %v547 = vsub.f32 1.0, %v546
  %v548 = vmul.f32 %v545, %v547
  %v549 = vadd.f32 %v545, %v548
  %vm550 = vweird.f32 %v544
  %vm551 = vweird.f32 %v545
  %vm552 = vmor %vm550, %vm551
  %v553 = vsel %vm552, %v545, %v549
  %v554 = vand.u32 2147483647, %v544
  %vm555 = vcmp.eq.f32.partialorder %v554, 8.507059e+37
  %v556 = vand.u32 %v544, 2147483648
  %v557 = vor.u32 1.1754944e-38, %v556
  %v558 = vsel %vm555, %v557, %v553
  %v559 = vmul.f32 1.0, %v558
  %v560 = vmul.f32 %v559, %v489
  %562 = vrot.lane.b32.xlu0 %v559, 64
  %v563 = vpop.permute.xlu0 %562
  %v565 = vsub.f32 %v559, %v563
  %567 = vrot.lane.b32.xlu0 %v565, 96
  %v568 = vpop.permute.xlu0 %567
  %v570 = vadd.f32 %v560, %v568
  %v571 = vxor.u32 %v570, 2147483648
  %v572 = vmul.f32 %v571, 1.442695
  %v573 = vpow.pop %v572
  %v574 = vadd.f32 %v573, 1.0
  %v575 = vrcp.pop %v574
  %v576 = vmul.f32 %v574, %v575
  %v577 = vsub.f32 1.0, %v576
  %v578 = vmul.f32 %v575, %v577
  %v579 = vadd.f32 %v575, %v578
  %vm580 = vweird.f32 %v574
  %vm581 = vweird.f32 %v575
  %vm582 = vmor %vm580, %vm581
  %v583 = vsel %vm582, %v575, %v579
  %v584 = vand.u32 2147483647, %v574
  %vm585 = vcmp.eq.f32.partialorder %v584, 8.507059e+37
  %v586 = vand.u32 %v574, 2147483648
  %v587 = vor.u32 1.1754944e-38, %v586
  %v588 = vsel %vm585, %v587, %v583
  %v589 = vmul.f32 1.0, %v588
  %v590 = vsub.f32 %v589, %v563
  %592 = vrot.lane.b32.xlu0 %v590, 96
  %v593 = vpop.permute.xlu0 %592
  %s595 = scalar_lea.vmem %s2, 48
  %596 = vst.msk [vmem:[%s595] sm:$0xff] %vm27, %v593
  %s597 = scalar_lea.vmem %s0, 56
  %v598 = vld [vmem:[%s597] sm:$0xff]
  %v599 = vsel %vm27, %v593, 0
  %601 = vmatpush.msra.mxu0 0.0
  %602 = vmatpush.msra.mxu0 0.0
  %603 = vmatpush.msra.mxu0 0.0
  %604 = vmatpush.msra.mxu0 0.0
  %605 = vmatpush.msra.mxu0 0.0
  %606 = vmatpush.msra.mxu0 0.0
  %607 = vmatpush.msra.mxu0 0.0
  %608 = vmatpush.msra.mxu0 0.0
  %609 = vmatpush.msra.mxu0 0.0
  %610 = vmatpush.msra.mxu0 0.0
  %611 = vmatpush.msra.mxu0 0.0
  %612 = vmatpush.msra.mxu0 0.0
  %613 = vmatpush.msra.mxu0 %v23
  %614 = vmatpush.msra.mxu0 %v22
  %615 = vmatpush.msra.mxu0 %v21
  %616 = vmatpush.msra.mxu0 %v20
  %617 = vmatmul.f32.gmra.mxu0 %v599
  %v618 = vpop.f32.mrf.mxu0
  %v619 = vadd.f32 0.0, %v618
  %620 = vdwg.mxu0
  %v621 = vadd.f32 %v598, %v619
  %v622 = vxor.u32 %v621, 2147483648
  %v623 = vmul.f32 %v622, 1.442695
  %v624 = vpow.pop %v623
  %v625 = vadd.f32 %v624, 1.0
  %v626 = vrcp.pop %v625
  %v627 = vmul.f32 %v625, %v626
  %v628 = vsub.f32 1.0, %v627
  %v629 = vmul.f32 %v626, %v628
  %v630 = vadd.f32 %v626, %v629
  %vm631 = vweird.f32 %v625
  %vm632 = vweird.f32 %v626
  %vm633 = vmor %vm631, %vm632
  %v634 = vsel %vm633, %v626, %v630
  %v635 = vand.u32 2147483647, %v625
  %vm636 = vcmp.eq.f32.partialorder %v635, 8.507059e+37
  %v637 = vand.u32 %v625, 2147483648
  %v638 = vor.u32 1.1754944e-38, %v637
  %v639 = vsel %vm636, %v638, %v634
  %v640 = vmul.f32 1.0, %v639
  %v641 = vmul.f32 %v640, %v570
  %643 = vrot.lane.b32.xlu0 %v640, 64
  %v644 = vpop.permute.xlu0 %643
  %v646 = vsub.f32 %v640, %v644
  %648 = vrot.lane.b32.xlu0 %v646, 96
  %v649 = vpop.permute.xlu0 %648
  %v651 = vadd.f32 %v641, %v649
  %v652 = vxor.u32 %v651, 2147483648
  %v653 = vmul.f32 %v652, 1.442695
  %v654 = vpow.pop %v653
  %v655 = vadd.f32 %v654, 1.0
  %v656 = vrcp.pop %v655
  %v657 = vmul.f32 %v655, %v656
  %v658 = vsub.f32 1.0, %v657
  %v659 = vmul.f32 %v656, %v658
  %v660 = vadd.f32 %v656, %v659
  %vm661 = vweird.f32 %v655
  %vm662 = vweird.f32 %v656
  %vm663 = vmor %vm661, %vm662
  %v664 = vsel %vm663, %v656, %v660
  %v665 = vand.u32 2147483647, %v655
  %vm666 = vcmp.eq.f32.partialorder %v665, 8.507059e+37
  %v667 = vand.u32 %v655, 2147483648
  %v668 = vor.u32 1.1754944e-38, %v667
  %v669 = vsel %vm666, %v668, %v664
  %v670 = vmul.f32 1.0, %v669
  %v671 = vsub.f32 %v670, %v644
  %673 = vrot.lane.b32.xlu0 %v671, 96
  %v674 = vpop.permute.xlu0 %673
  %s676 = scalar_lea.vmem %s2, 56
  %677 = vst.msk [vmem:[%s676] sm:$0xff] %vm27, %v674
  %678 = vst.msk [vmem:[#allocation2] sm:$0xff] %vm27, %v674
  %680 = vrot.lane.b32.xlu0 %v651, 96
  %v681 = vpop.permute.xlu0 %680
  %683 = vst.msk [vmem:[#allocation3] sm:$0xff] %vm27, %v681
  // Predicated region
  $region14: #{sublstm_forward.1} parent=0 // pred_check
    %p684 = pneg %p13
  $region15: #{sublstm_forward.1} parent=0 // pred_check_branch
    %686 = sbr.rel (%p684) target = $region17
  $region16: #{sublstm_forward.1} parent=0 // pred_region
    %687 = vst.msk [vmem:[%s3] sm:$0xff] %vm27, %v681
  $region17: #{sublstm_forward.1} parent=0 // pred_fallthru
    _
  // Predicated region
  $region18: #{sublstm_forward.1} parent=0 // pred_check
    _
  $region19: #{sublstm_forward.1} parent=0 // pred_check_branch
    %689 = sbr.rel (0) target = $region21
  $region20: #{sublstm_forward.1} parent=0 // pred_region
    _
  $region21: #{sublstm_forward.1} parent=0 // pred_fallthru
    _
  // Predicated region
  $region22: #{sublstm_forward.1} parent=0 // pred_check
    _
  $region23: #{sublstm_forward.1} parent=0 // pred_check_branch
    %691 = sbr.rel (0) target = $region25
  $region24: #{sublstm_forward.1} parent=0 // pred_region
    _
  $region25: #{sublstm_forward.1} parent=0 // pred_fallthru
    _
  // Predicated region
  $region26: #{sublstm_forward.1} parent=0 // pred_check
    _
  $region27: #{sublstm_forward.1} parent=0 // pred_check_branch
    %693 = sbr.rel (0) target = $region29
  $region28: #{sublstm_forward.1} parent=0 // pred_region
    _
  $region29: #{sublstm_forward.1} parent=0 // pred_fallthru
    _
  // Predicated region
  $region30: #{sublstm_forward.1} parent=0 // pred_check
    _
  $region31: #{sublstm_forward.1} parent=0 // pred_check_branch
    %695 = sbr.rel (0) target = $region33
  $region32: #{sublstm_forward.1} parent=0 // pred_region
    _
  $region33: #{sublstm_forward.1} parent=0 // pred_fallthru
    _

</llo_original>
